<compile_context>
chip_gen: v5e
topology: v5e:2x2
jax: 0.10.0
libtpu: 0.0.40
codegen_flags: <defaults>
</compile_context>

<pallas_src>
import functools
import math

import jax
import jax.numpy as jnp
from jax.experimental import pallas as pl
from jax.experimental.pallas import tpu as pltpu


# bf16 matmul operands (f32 accumulation) -> native MXU path on v5e/v6e/v7x.
# Set to None to keep f32 operands (bitwise-closer to the PyTorch f32 reference).
MATMUL_COMPUTE_DTYPE = jnp.bfloat16


def _maybe_cast(x):
    return x if MATMUL_COMPUTE_DTYPE is None else x.astype(MATMUL_COMPUTE_DTYPE)


def _sublane_align():
    # bf16 packs two rows per sublane -> (16,128) min tile for matmul operands.
    return 16 if MATMUL_COMPUTE_DTYPE == jnp.bfloat16 else 8


def _pick_tile(dim, want, align):
    """Largest tile <= want that divides dim and is a multiple of align, else full dim."""
    if dim <= want:
        return dim
    for t in range(want, align - 1, -align):
        if dim % t == 0:
            return t
    return dim  # fallback: full dim (always legal; may cost VMEM for awkward sizes)


# ----------------------------------------------------------------------------
# Tiled linear:  y = act((x [+ add]) @ w + b)
# ----------------------------------------------------------------------------
def _linear_kernel(*refs, activation, fuse_add, n_k):
    if fuse_add:
        x_ref, a_ref, w_ref, b_ref, o_ref, acc_ref = refs
    else:
        x_ref, w_ref, b_ref, o_ref, acc_ref = refs
        a_ref = None

    @pl.when(pl.program_id(2) == 0)
    def _init():
        acc_ref[...] = jnp.zeros_like(acc_ref)

    x = x_ref[...]
    if a_ref is not None:
        x = x + a_ref[...]          # fused positional add (VPU op under the matmul)
    acc_ref[...] += jnp.dot(_maybe_cast(x), _maybe_cast(w_ref[...]),
                            preferred_element_type=jnp.float32)

    @pl.when(pl.program_id(2) == n_k - 1)
    def _finalize():
        y = acc_ref[...] + b_ref[...].astype(jnp.float32)
        if activation == "relu":
            y = jnp.maximum(y, 0.0)
        o_ref[...] = y.astype(o_ref.dtype)


def pallas_linear(x, w, b, activation=None, add=None, tm=512, tn=256, tk=512):
    """x: (M, K), w: (K, N), b: (N,), optional add: (M, K) -> (M, N)."""
    M, K = x.shape
    N = w.shape[1]
    tm = _pick_tile(M, tm, _sublane_align())
    tn = _pick_tile(N, tn, 128)
    tk = _pick_tile(K, tk, 128)
    gm, gn, gk = M // tm, N // tn, K // tk

    in_specs = [pl.BlockSpec((tm, tk), lambda i, j, k: (i, k))]
    args = [x]
    if add is not None:
        in_specs.append(pl.BlockSpec((tm, tk), lambda i, j, k: (i, k)))
        args.append(add)
    in_specs += [pl.BlockSpec((tk, tn), lambda i, j, k: (k, j)),
                 pl.BlockSpec((1, tn), lambda i, j, k: (0, j))]
    args += [w, b.reshape(1, N)]

    return pl.pallas_call(
        functools.partial(_linear_kernel, activation=activation,
                          fuse_add=add is not None, n_k=gk),
        out_shape=jax.ShapeDtypeStruct((M, N), x.dtype),
        grid=(gm, gn, gk),
        in_specs=in_specs,
        out_specs=pl.BlockSpec((tm, tn), lambda i, j, k: (i, j)),
        scratch_shapes=[pltpu.VMEM((tm, tn), jnp.float32)],
        compiler_params=pltpu.CompilerParams(
            dimension_semantics=("parallel", "parallel", "arbitrary")),
    )(*args)


# ----------------------------------------------------------------------------
# Tiled linear with fused residual-add + LayerNorm epilogue:
#   out = LayerNorm(x @ w + b + residual)       (N kept whole for the row stats)
# ----------------------------------------------------------------------------
def _linear_res_ln_kernel(x_ref, w_ref, b_ref, r_ref, g_ref, be_ref, o_ref, acc_ref,
                          *, eps, n_k):
    @pl.when(pl.program_id(1) == 0)
    def _init():
        acc_ref[...] = jnp.zeros_like(acc_ref)

    acc_ref[...] += jnp.dot(_maybe_cast(x_ref[...]), _maybe_cast(w_ref[...]),
                            preferred_element_type=jnp.float32)

    @pl.when(pl.program_id(1) == n_k - 1)
    def _finalize():
        y = acc_ref[...] + b_ref[...].astype(jnp.float32) + r_ref[...].astype(jnp.float32)
        mean = jnp.mean(y, axis=-1, keepdims=True)
        yc = y - mean
        var = jnp.mean(yc * yc, axis=-1, keepdims=True)
        yn = yc * jax.lax.rsqrt(var + eps)
        o_ref[...] = (yn * g_ref[...].astype(jnp.float32)
                      + be_ref[...].astype(jnp.float32)).astype(o_ref.dtype)


def pallas_linear_residual_ln(x, w, b, residual, gamma, beta, eps=1e-5, tm=512, tk=512):
    """x: (M, K), w: (K, N), residual: (M, N), gamma/beta: (N,) -> (M, N)."""
    M, K = x.shape
    N = w.shape[1]
    tm = _pick_tile(M, tm, _sublane_align())
    tk = _pick_tile(K, tk, 128)
    gm, gk = M // tm, K // tk
    return pl.pallas_call(
        functools.partial(_linear_res_ln_kernel, eps=eps, n_k=gk),
        out_shape=jax.ShapeDtypeStruct((M, N), x.dtype),
        grid=(gm, gk),
        in_specs=[
            pl.BlockSpec((tm, tk), lambda i, k: (i, k)),
            pl.BlockSpec((tk, N), lambda i, k: (k, 0)),
            pl.BlockSpec((1, N), lambda i, k: (0, 0)),
            pl.BlockSpec((tm, N), lambda i, k: (i, 0)),
            pl.BlockSpec((1, N), lambda i, k: (0, 0)),
            pl.BlockSpec((1, N), lambda i, k: (0, 0)),
        ],
        out_specs=pl.BlockSpec((tm, N), lambda i, k: (i, 0)),
        scratch_shapes=[pltpu.VMEM((tm, N), jnp.float32)],
        compiler_params=pltpu.CompilerParams(
            dimension_semantics=("parallel", "arbitrary")),
    )(x, w, b.reshape(1, N), residual, gamma.reshape(1, N), beta.reshape(1, N))


# ----------------------------------------------------------------------------
# Attention core: grid (B, Lq//tq); K/V resident per batch; heads packed in E.
# Q is pre-scaled (scale folded into the Q projection weights).
# ----------------------------------------------------------------------------
def _attn_kernel(*refs, nhead, need_weights):
    if need_weights:
        q_ref, k_ref, v_ref, o_ref, w_ref = refs
    else:
        q_ref, k_ref, v_ref, o_ref = refs
        w_ref = None

    E = q_ref.shape[-1]
    Dh = E // nhead
    inv_h = 1.0 / nhead
    w_acc = None
    for h in range(nhead):
        sl = slice(h * Dh, (h + 1) * Dh)
        qh = q_ref[0, :, sl]                         # (tq, Dh)   ref slice: no big live value
        kh = k_ref[0, :, sl]                         # (Lk, Dh)
        vh = v_ref[0, :, sl]                         # (Lk, Dh)
        s = jnp.dot(_maybe_cast(qh), _maybe_cast(kh).T,
                    preferred_element_type=jnp.float32)          # (tq, Lk)
        m = jnp.max(s, axis=-1, keepdims=True)
        p = jnp.exp(s - m)
        denom = jnp.sum(p, axis=-1, keepdims=True)
        pn = p * pl.reciprocal(denom, approx=False)  # exact: exported weight rows sum to 1
        # write this head's output directly (no concat, no per-head live outputs)
        o_ref[0, :, sl] = jnp.dot(_maybe_cast(pn), _maybe_cast(vh),
                                  preferred_element_type=jnp.float32).astype(o_ref.dtype)
        if need_weights:
            w_acc = pn * inv_h if w_acc is None else w_acc + pn * inv_h
    if need_weights:
        w_ref[0] = w_acc.astype(w_ref.dtype)


def pallas_attention(q, k, v, nhead, need_weights=True, tq=256):
    """q: (B, Lq, E) pre-scaled; k/v: (B, Lk, E) -> (out (B, Lq, E), weights (B, Lq, Lk) | None)."""
    B, Lq, E = q.shape
    Lk = k.shape[1]
    tq = _pick_tile(Lq, tq, 8)

    out_shapes = [jax.ShapeDtypeStruct((B, Lq, E), q.dtype)]
    out_specs = [pl.BlockSpec((1, tq, E), lambda b, i: (b, i, 0))]
    if need_weights:
        out_shapes.append(jax.ShapeDtypeStruct((B, Lq, Lk), q.dtype))
        out_specs.append(pl.BlockSpec((1, tq, Lk), lambda b, i: (b, i, 0)))

    res = pl.pallas_call(
        functools.partial(_attn_kernel, nhead=nhead, need_weights=need_weights),
        out_shape=tuple(out_shapes),
        grid=(B, Lq // tq),
        in_specs=[pl.BlockSpec((1, tq, E), lambda b, i: (b, i, 0)),
                  pl.BlockSpec((1, Lk, E), lambda b, i: (b, 0, 0)),   # K resident per batch
                  pl.BlockSpec((1, Lk, E), lambda b, i: (b, 0, 0))],  # V resident per batch
        out_specs=tuple(out_specs),
        compiler_params=pltpu.CompilerParams(
            dimension_semantics=("parallel", "parallel")),
    )(q, k, v)
    if need_weights:
        return res[0], res[1]
    return res[0], None


# ----------------------------------------------------------------------------
# TransformerDecoderLayer.forward_post (normalize_before=False, eval mode)
# ----------------------------------------------------------------------------
def transformer_decoder_layer(tgt, memory, params, nhead, pos=None, query_pos=None,
                              eps=1e-5, need_weights=True):
    L, B, E = tgt.shape
    Lm = memory.shape[0]
    scale = 1.0 / math.sqrt(E // nhead)

    # One-time layout change to batch-first; all intermediates stay (B*, E) / (B, L, E).
    tgt_b = jnp.transpose(tgt, (1, 0, 2)).reshape(B * L, E)
    mem_b = jnp.transpose(memory, (1, 0, 2)).reshape(B * Lm, E)
    qpos_b = (jnp.transpose(query_pos, (1, 0, 2)).reshape(B * L, E)
              if query_pos is not None else None)
    pos_b = (jnp.transpose(pos, (1, 0, 2)).reshape(B * Lm, E)
             if pos is not None else None)

    # --- self attention: Q/K/V projections (+query_pos fused), scale folded into Wq ---
    p = params["self_attn"]
    q = pallas_linear(tgt_b, p["wq"] * scale, p["bq"] * scale, add=qpos_b)   # (B*L, E)
    k = pallas_linear(tgt_b, p["wk"], p["bk"], add=qpos_b)                   # (B*L, E)
    v = pallas_linear(tgt_b, p["wv"], p["bv"])                               # (B*L, E)
    attn_out, self_w = pallas_attention(q.reshape(B, L, E), k.reshape(B, L, E),
                                        v.reshape(B, L, E), nhead,
                                        need_weights=need_weights)
    # out-projection + residual + LayerNorm1 fused in one kernel
    tgt1 = pallas_linear_residual_ln(attn_out.reshape(B * L, E), p["wo"], p["bo"],
                                     tgt_b, params["ln1_g"], params["ln1_b"], eps=eps)

    # --- cross attention ---
    p = params["cross_attn"]
    q = pallas_linear(tgt1, p["wq"] * scale, p["bq"] * scale, add=qpos_b)    # (B*L, E)
    k = pallas_linear(mem_b, p["wk"], p["bk"], add=pos_b)                    # (B*Lm, E)
    v = pallas_linear(mem_b, p["wv"], p["bv"])                               # (B*Lm, E)
    attn_out, cross_w = pallas_attention(q.reshape(B, L, E), k.reshape(B, Lm, E),
                                         v.reshape(B, Lm, E), nhead,
                                         need_weights=need_weights)
    tgt2 = pallas_linear_residual_ln(attn_out.reshape(B * L, E), p["wo"], p["bo"],
                                     tgt1, params["ln2_g"], params["ln2_b"], eps=eps)

    # --- feed-forward: linear1+ReLU, then linear2 + residual + LayerNorm3 fused ---
    h = pallas_linear(tgt2, params["w1"], params["b1"], activation="relu")
    tgt3 = pallas_linear_residual_ln(h, params["w2"], params["b2"],
                                     tgt2, params["ln3_g"], params["ln3_b"], eps=eps)

    out = jnp.transpose(tgt3.reshape(B, L, E), (1, 0, 2))                    # back to (L, B, E)
    return out, self_w, cross_w


# ----------------------------------------------------------------------------
# Deterministic parameter init (weights stored as y = x @ W)
# ----------------------------------------------------------------------------
def init_params(key, d_model, nhead, dim_ff):
    ks = jax.random.split(key, 10)
    s = 0.02

    def w(k, shape):
        return jax.random.normal(k, shape, jnp.float32) * s

    def attn_params(k0, k1, k2, k3):
        return {
            "wq": w(k0, (d_model, d_model)), "bq": jnp.zeros((d_model,), jnp.float32),
            "wk": w(k1, (d_model, d_model)), "bk": jnp.zeros((d_model,), jnp.float32),
            "wv": w(k2, (d_model, d_model)), "bv": jnp.zeros((d_model,), jnp.float32),
            "wo": w(k3, (d_model, d_model)), "bo": jnp.zeros((d_model,), jnp.float32),
        }

    return {
        "self_attn": attn_params(ks[0], ks[1], ks[2], ks[3]),
        "cross_attn": attn_params(ks[4], ks[5], ks[6], ks[7]),
        "w1": w(ks[8], (d_model, dim_ff)),
        "b1": jnp.zeros((dim_ff,), jnp.float32),
        "w2": w(ks[9], (dim_ff, d_model)),
        "b2": jnp.zeros((d_model,), jnp.float32),
        "ln1_g": jnp.ones((d_model,), jnp.float32),
        "ln1_b": jnp.zeros((d_model,), jnp.float32),
        "ln2_g": jnp.ones((d_model,), jnp.float32),
        "ln2_b": jnp.zeros((d_model,), jnp.float32),
        "ln3_g": jnp.ones((d_model,), jnp.float32),
        "ln3_b": jnp.zeros((d_model,), jnp.float32),
    }


if __name__ == "__main__":
    d_model, nhead, dim_ff = 32, 4, 64
    L_tgt, L_mem, batch = 8, 8, 2

    key = jax.random.PRNGKey(0)
    kp, k1, k2, k3, k4 = jax.random.split(key, 5)

    params = init_params(kp, d_model, nhead, dim_ff)
    tgt = jax.random.normal(k1, (L_tgt, batch, d_model), jnp.float32)
    memory = jax.random.normal(k2, (L_mem, batch, d_model), jnp.float32)
    query_pos = jax.random.normal(k3, (L_tgt, batch, d_model), jnp.float32)
    pos = jax.random.normal(k4, (L_mem, batch, d_model), jnp.float32)

    out, self_w, cross_w = transformer_decoder_layer(
        tgt, memory, params, nhead, pos=pos, query_pos=query_pos)
    jax.block_until_ready((out, self_w, cross_w))

    assert out.shape == (L_tgt, batch, d_model)
    assert self_w.shape == (batch, L_tgt, L_tgt)
    assert cross_w.shape == (batch, L_tgt, L_mem)
    assert bool(jnp.all(jnp.isfinite(out)))
    assert bool(jnp.all(jnp.isfinite(self_w))) and bool(jnp.all(jnp.isfinite(cross_w)))
    print("KERNEL_OK")
</pallas_src>

<mosaic_0001>
module attributes {stable_mosaic.version = 11 : i64} {
  func.func @_linear_kernel(%arg0: i32, %arg1: i32, %arg2: i32, %arg3: memref<16x32xf32, #tpu.memory_space<vmem>>, %arg4: memref<16x32xf32, #tpu.memory_space<vmem>>, %arg5: memref<32x32xf32, #tpu.memory_space<vmem>>, %arg6: memref<1x32xf32, #tpu.memory_space<vmem>>, %arg7: memref<16x32xf32, #tpu.memory_space<vmem>>, %arg8: memref<16x32xf32, #tpu.memory_space<vmem>>) attributes {dimension_semantics = [#tpu.dimension_semantics<parallel>, #tpu.dimension_semantics<parallel>, #tpu.dimension_semantics<arbitrary>], iteration_bounds = array<i64: 1, 1, 1>, scalar_prefetch = 0 : i64, scratch_operands = 1 : i64, tpu.core_type = #tpu.core_type<tc>, window_params = [{transform_indices = @transform_0, window_bounds = array<i64: 16, 32>}, {transform_indices = @transform_1, window_bounds = array<i64: 16, 32>}, {transform_indices = @transform_2, window_bounds = array<i64: 32, 32>}, {transform_indices = @transform_3, window_bounds = array<i64: 1, 32>}, {transform_indices = @transform_4, window_bounds = array<i64: 16, 32>}]} {
    %c0_i32 = arith.constant 0 : i32
    %0 = arith.cmpi eq, %arg2, %c0_i32 : i32
    %1 = arith.extui %0 : i1 to i32
    %c0_i32_0 = arith.constant 0 : i32
    %2 = arith.cmpi ne, %1, %c0_i32_0 : i32
    scf.if %2 {
      %cst_12 = arith.constant 0.000000e+00 : f32
      %16 = vector.broadcast %cst_12 : f32 to vector<16x32xf32>
      %c0_13 = arith.constant 0 : index
      %c0_14 = arith.constant 0 : index
      %17 = vector.load %arg8[%c0_13, %c0_14] : memref<16x32xf32, #tpu.memory_space<vmem>>, vector<16x32xf32>
      tpu.vector_store %arg8[%c0_13, %c0_14], %16 {strides = array<i32>} : memref<16x32xf32, #tpu.memory_space<vmem>>, vector<16x32xf32>,
    } else {
    }
    %c0 = arith.constant 0 : index
    %c0_1 = arith.constant 0 : index
    %3 = vector.load %arg3[%c0, %c0_1] : memref<16x32xf32, #tpu.memory_space<vmem>>, vector<16x32xf32>
    %c0_2 = arith.constant 0 : index
    %c0_3 = arith.constant 0 : index
    %4 = vector.load %arg4[%c0_2, %c0_3] : memref<16x32xf32, #tpu.memory_space<vmem>>, vector<16x32xf32>
    %5 = arith.addf %3, %4 : vector<16x32xf32>
    %c0_4 = arith.constant 0 : index
    %c0_5 = arith.constant 0 : index
    %6 = vector.load %arg8[%c0_4, %c0_5] : memref<16x32xf32, #tpu.memory_space<vmem>>, vector<16x32xf32>
    %7 = arith.truncf %5 : vector<16x32xf32> to vector<16x32xbf16>
    %c0_6 = arith.constant 0 : index
    %c0_7 = arith.constant 0 : index
    %8 = vector.load %arg5[%c0_6, %c0_7] : memref<32x32xf32, #tpu.memory_space<vmem>>, vector<32x32xf32>
    %9 = arith.truncf %8 : vector<32x32xf32> to vector<32x32xbf16>
    %cst = arith.constant dense<0.000000e+00> : vector<16x32xf32>
    %10 = tpu.matmul %7, %9, %cst {dimension_numbers = #tpu.dot_dimension_numbers<[1], [0], [0], [1], [0, 0, 1, 1], [], []>} : vector<16x32xbf16>, vector<32x32xbf16>, vector<16x32xf32> -> vector<16x32xf32>
    %11 = arith.addf %6, %10 : vector<16x32xf32>
    %c0_8 = arith.constant 0 : index
    %c0_9 = arith.constant 0 : index
    %12 = vector.load %arg8[%c0_8, %c0_9] : memref<16x32xf32, #tpu.memory_space<vmem>>, vector<16x32xf32>
    tpu.vector_store %arg8[%c0_8, %c0_9], %11 {strides = array<i32>} : memref<16x32xf32, #tpu.memory_space<vmem>>, vector<16x32xf32>,
    %c0_i32_10 = arith.constant 0 : i32
    %13 = arith.cmpi eq, %arg2, %c0_i32_10 : i32
    %14 = arith.extui %13 : i1 to i32
    %c0_i32_11 = arith.constant 0 : i32
    %15 = arith.cmpi ne, %14, %c0_i32_11 : i32
    scf.if %15 {
      %c0_12 = arith.constant 0 : index
      %c0_13 = arith.constant 0 : index
      %16 = vector.load %arg8[%c0_12, %c0_13] : memref<16x32xf32, #tpu.memory_space<vmem>>, vector<16x32xf32>
      %c0_14 = arith.constant 0 : index
      %c0_15 = arith.constant 0 : index
      %17 = vector.load %arg6[%c0_14, %c0_15] : memref<1x32xf32, #tpu.memory_space<vmem>>, vector<1x32xf32>
      %18 = vector.broadcast %17 : vector<1x32xf32> to vector<16x32xf32>
      %19 = arith.addf %16, %18 : vector<16x32xf32>
      %c0_16 = arith.constant 0 : index
      %c0_17 = arith.constant 0 : index
      %20 = vector.load %arg7[%c0_16, %c0_17] : memref<16x32xf32, #tpu.memory_space<vmem>>, vector<16x32xf32>
      tpu.vector_store %arg7[%c0_16, %c0_17], %19 {strides = array<i32>} : memref<16x32xf32, #tpu.memory_space<vmem>>, vector<16x32xf32>,
    } else {
    }
    return
  }
  func.func @transform_0(%arg0: i32, %arg1: i32, %arg2: i32) -> (i32, i32) {
    %c0_i32 = arith.constant 0 : i32
    return %arg0, %arg2 : i32, i32
  }
  func.func @transform_1(%arg0: i32, %arg1: i32, %arg2: i32) -> (i32, i32) {
    %c0_i32 = arith.constant 0 : i32
    return %arg0, %arg2 : i32, i32
  }
  func.func @transform_2(%arg0: i32, %arg1: i32, %arg2: i32) -> (i32, i32) {
    %c0_i32 = arith.constant 0 : i32
    return %arg2, %arg1 : i32, i32
  }
  func.func @transform_3(%arg0: i32, %arg1: i32, %arg2: i32) -> (i32, i32) {
    %c0_i32 = arith.constant 0 : i32
    %c0_i32_0 = arith.constant 0 : i32
    return %c0_i32, %arg1 : i32, i32
  }
  func.func @transform_4(%arg0: i32, %arg1: i32, %arg2: i32) -> (i32, i32) {
    %c0_i32 = arith.constant 0 : i32
    return %arg0, %arg1 : i32, i32
  }
}

</mosaic_0001>

<llo_original>
// kernel: tpu_custom_call.1
$region0: #{tpu_custom_call.1}
  #allocation0 [shape = 'u32[]', space=smem, size = 0x4, offset = 0x4, fixed_abs, tag = 'smem constant byte address 0x4 - core index']
  #allocation1 [shape = 'u32[72,128]{1,0:T(1,128)}', space=vmem, size = 0x9000, scoped, tag = 'internal scratch']
  #allocation2 [shape = 'f32[16,32]{1,0:T(8,128)}', space=vmem, size = 0x2000, scoped, tag = 'scratch operand']
  %s0 = inlined_call_operand.hbm [shape: f32[16,32], index: 0, kind: input, shape index: {}]
  %s1 = inlined_call_operand.hbm [shape: f32[16,32], index: 1, kind: input, shape index: {}]
  %s2 = inlined_call_operand.hbm [shape: f32[32,32], index: 2, kind: input, shape index: {}]
  %s3 = inlined_call_operand.vmem [shape: f32[1,32], index: 3, kind: input, shape index: {}]
  %s4 = inlined_call_operand.hbm [shape: f32[16,32], index: 4, kind: output, shape index: {}]
  %s5 = sld [smem:[#allocation0]]
  $region46: #{tpu_custom_call.1} parent=0
    _
  %s7 = ssub.s32 1, %s5
  %s8 = scalar_select 0, %s7, %s5
  $region1: #{tpu_custom_call.1} parent=0
    #allocation3 [shape = 'u8[8192]{0}', space=vmem, size = 0x2000, scoped, tag = 'input window, operand 0, single buffered']
    #allocation4 [shape = 's32[1]{0}', space=sflag, size = 0x4, scoped, tag = 'scoped memory for tpu_custom_call.1']
    #allocation5 [shape = 's32[1]{0}', space=sflag, size = 0x4, scoped, tag = 'scoped memory for tpu_custom_call.1']
    #allocation6 [shape = 'u8[8192]{0}', space=vmem, size = 0x2000, scoped, tag = 'input window, operand 1, single buffered']
    #allocation7 [shape = 's32[1]{0}', space=sflag, size = 0x4, scoped, tag = 'scoped memory for tpu_custom_call.1']
    #allocation8 [shape = 'u8[16384]{0}', space=vmem, size = 0x4000, scoped, tag = 'input window, operand 2, single buffered']
    #allocation9 [shape = 'u8[8192]{0}', space=vmem, size = 0x2000, scoped, tag = 'output window, operand 0, single buffered']
    %9 = vsyncpa [#allocation4], 0
    %10 = vsyncpa [#allocation7], 0
    %11 = vsyncpa [#allocation5], 0
    // Predicated region
    $region2: #{tpu_custom_call.1} parent=1 // pred_check
      _
    $region3: #{tpu_custom_call.1} parent=1 // pred_check_branch
      %13 = sbr.rel (0) target = $region5
    $region4: #{tpu_custom_call.1} parent=1 // pred_region
      %15 = vsyncadd [#allocation4], 0
      %s16 = sshll.u32 %s0, 4
      %s17 = int_to_ptr.hbm [resolvable:$true] %s16
      %s18 = sshll.u32 [#allocation3], 4
      %s19 = int_to_ptr.vmem [resolvable:$true] %s18
      %24 = dma.hbm_to_vmem [thread:$0]  %s17, 256, %s19, [#allocation4], 128, 128, 8
    $region5: #{tpu_custom_call.1} parent=1 // pred_fallthru
      _
    // Predicated region
    $region6: #{tpu_custom_call.1} parent=1 // pred_check
      _
    $region7: #{tpu_custom_call.1} parent=1 // pred_check_branch
      %26 = sbr.rel (0) target = $region9
    $region8: #{tpu_custom_call.1} parent=1 // pred_region
      %28 = vsyncadd [#allocation7], 0
      %s29 = sshll.u32 %s1, 4
      %s30 = int_to_ptr.hbm [resolvable:$true] %s29
      %s31 = sshll.u32 [#allocation6], 4
      %s32 = int_to_ptr.vmem [resolvable:$true] %s31
      %37 = dma.hbm_to_vmem [thread:$0]  %s30, 256, %s32, [#allocation7], 128, 128, 8
    $region9: #{tpu_custom_call.1} parent=1 // pred_fallthru
      _
    // Predicated region
    $region10: #{tpu_custom_call.1} parent=1 // pred_check
      _
    $region11: #{tpu_custom_call.1} parent=1 // pred_check_branch
      %39 = sbr.rel (0) target = $region13
    $region12: #{tpu_custom_call.1} parent=1 // pred_region
      %41 = vsyncadd [#allocation7], 0
      %s42 = sshll.u32 %s2, 4
      %s43 = int_to_ptr.hbm [resolvable:$true] %s42
      %s44 = sshll.u32 [#allocation8], 4
      %s45 = int_to_ptr.vmem [resolvable:$true] %s44
      %50 = dma.hbm_to_vmem [thread:$0]  %s43, 512, %s45, [#allocation7], 128, 128, 8
    $region13: #{tpu_custom_call.1} parent=1 // pred_fallthru
      _
    // Predicated region
    $region14: #{tpu_custom_call.1} parent=1 // pred_check
      _
    $region15: #{tpu_custom_call.1} parent=1 // pred_check_branch
      %52 = sbr.rel (0) target = $region17
    $region16: #{tpu_custom_call.1} parent=1 // pred_region
      _
    $region17: #{tpu_custom_call.1} parent=1 // pred_fallthru
      _
    // Predicated region
    $region18: #{tpu_custom_call.1} parent=1 // pred_check
      _
    $region19: #{tpu_custom_call.1} parent=1 // pred_check_branch
      %54 = sbr.rel (0) target = $region21
    $region20: #{tpu_custom_call.1} parent=1 // pred_region
      %56 = dma.done [#allocation4], 256
    $region21: #{tpu_custom_call.1} parent=1 // pred_fallthru
      _
    // Predicated region
    $region22: #{tpu_custom_call.1} parent=1 // pred_check
      _
    $region23: #{tpu_custom_call.1} parent=1 // pred_check_branch
      %58 = sbr.rel (0) target = $region25
    $region24: #{tpu_custom_call.1} parent=1 // pred_region
      %60 = dma.done [#allocation7], 256
    $region25: #{tpu_custom_call.1} parent=1 // pred_fallthru
      _
    // Predicated region
    $region26: #{tpu_custom_call.1} parent=1 // pred_check
      _
    $region27: #{tpu_custom_call.1} parent=1 // pred_check_branch
      %62 = sbr.rel (0) target = $region29
    $region28: #{tpu_custom_call.1} parent=1 // pred_region
      %64 = dma.done [#allocation7], 512
    $region29: #{tpu_custom_call.1} parent=1 // pred_fallthru
      _
    %p66 = scmp.eq.s32.totalorder 0, 0
    // Predicated region
    $region30: #{tpu_custom_call.1} parent=1 // pred_check
      %p67 = pneg %p66
    $region31: #{tpu_custom_call.1} parent=1 // pred_check_branch
      %69 = sbr.rel (%p67) target = $region33
    $region32: #{tpu_custom_call.1} parent=1 // pred_region
      %vm70 = vcmask 261120
      %71 = vst.msk [vmem:[#allocation2] sm:$0xff] %vm70, 0.0
      %72 = vst.msk [vmem:[#allocation2 + $0x8] sm:$0xff] %vm70, 0.0
    $region33: #{tpu_custom_call.1} parent=1 // pred_fallthru
      _
    %v73 = vld [vmem:[#allocation3] sm:$0xff]
    %v74 = vld [vmem:[#allocation3 + $0x8] sm:$0xff]
    %v75 = vld [vmem:[#allocation6] sm:$0xff]
    %v76 = vld [vmem:[#allocation6 + $0x8] sm:$0xff]
    %v77 = vadd.f32 %v73, %v75
    %v78 = vadd.f32 %v74, %v76
    %v79 = vld [vmem:[#allocation2] sm:$0xff]
    %v80 = vld [vmem:[#allocation2 + $0x8] sm:$0xff]
    %v81 = vpack.c.bf16 %v78, %v77
    %v82 = vld [vmem:[#allocation8] sm:$0xff]
    %v83 = vld [vmem:[#allocation8 + $0x8] sm:$0xff]
    %v84 = vld [vmem:[#allocation8 + $0x10] sm:$0xff]
    %v85 = vld [vmem:[#allocation8 + $0x18] sm:$0xff]
    %v86 = vpack.c.bf16 %v83, %v82
    %v87 = vpack.c.bf16 %v85, %v84
    %vm88 = vcmask 261120
    %v90 = vsel %vm88, %v81, 0
    %92 = vmatpush.bf16.msra.mxu0 0
    %93 = vmatpush.bf16.msra.mxu0 0
    %94 = vmatpush.bf16.msra.mxu0 0
    %95 = vmatpush.bf16.msra.mxu0 0
    %96 = vmatpush.bf16.msra.mxu0 0
    %97 = vmatpush.bf16.msra.mxu0 0
    %98 = vmatpush.bf16.msra.mxu0 %v87
    %99 = vmatpush.bf16.msra.mxu0 %v86
    %100 = vmatmul.bf16.gmra.mxu0 %v90
    %v101 = vpop.f32.mrf.mxu0
    %v102 = vadd.f32 0.0, %v101
    %v103 = vpop.f32.mrf.mxu0
    %v104 = vadd.f32 0.0, %v103
    %105 = vdwg.mxu0
    %v106 = vadd.f32 %v79, %v102
    %v107 = vadd.f32 %v80, %v104
    %108 = vst.msk [vmem:[#allocation2] sm:$0xff] %vm88, %v106
    %109 = vst.msk [vmem:[#allocation2 + $0x8] sm:$0xff] %vm88, %v107
    // Predicated region
    $region34: #{tpu_custom_call.1} parent=1 // pred_check
      %p110 = pneg %p66
    $region35: #{tpu_custom_call.1} parent=1 // pred_check_branch
      %112 = sbr.rel (%p110) target = $region37
    $region36: #{tpu_custom_call.1} parent=1 // pred_region
      %v113 = vld [vmem:[#allocation2] sm:$0xff]
      %v114 = vld [vmem:[#allocation2 + $0x8] sm:$0xff]
      %v115 = vld [vmem:[%s3] sm:$0x1]
      %v117 = vperm.slane %v115, 0
      %v119 = vadd.f32 %v113, %v117
      %v120 = vadd.f32 %v114, %v117
      %121 = vst.msk [vmem:[#allocation9] sm:$0xff] %vm88, %v119
      %122 = vst.msk [vmem:[#allocation9 + $0x8] sm:$0xff] %vm88, %v120
    $region37: #{tpu_custom_call.1} parent=1 // pred_fallthru
      _
    // Predicated region
    $region38: #{tpu_custom_call.1} parent=1 // pred_check
      _
    $region39: #{tpu_custom_call.1} parent=1 // pred_check_branch
      %124 = sbr.rel (0) target = $region41
    $region40: #{tpu_custom_call.1} parent=1 // pred_region
      %126 = vsyncadd [#allocation5], 0
      %s127 = sshll.u32 [#allocation9], 4
      %s128 = int_to_ptr.vmem [resolvable:$true] %s127
      %s129 = sshll.u32 %s4, 4
      %s130 = int_to_ptr.hbm [resolvable:$true] %s129
      %135 = dma.vmem_to_hbm [thread:$0]  %s128, 256, %s130, [#allocation5], 128, 128, 8
    $region41: #{tpu_custom_call.1} parent=1 // pred_fallthru
      _
    // Predicated region
    $region42: #{tpu_custom_call.1} parent=1 // pred_check
      _
    $region43: #{tpu_custom_call.1} parent=1 // pred_check_branch
      %137 = sbr.rel (0) target = $region45
    $region44: #{tpu_custom_call.1} parent=1 // pred_region
      %139 = dma.done [#allocation5], 256
    $region45: #{tpu_custom_call.1} parent=1 // pred_fallthru
      _
    %140 = vsyncpa [#allocation4], 1
    %141 = vsyncpa [#allocation7], 1
    %142 = vsyncpa [#allocation5], 1

</llo_original>
